<compile_context>
chip_gen: v7x
topology: tpu7x:2x2x1
jax: 0.10.0
libtpu: 0.0.40
codegen_flags: <defaults>
</compile_context>

<pallas_src>
import jax
import jax.numpy as jnp
from jax.experimental import pallas as pl
from jax.experimental.pallas import tpu as pltpu


# ----------------------------------------------------------------------------
# Helpers
# ----------------------------------------------------------------------------
def _round_up(x, m):
    return ((x + m - 1) // m) * m


def xy_grid(height, width):
    """Regular [0,1] grid (mirrors obsbot_observer.xy_grid)."""
    x1 = jnp.linspace(0.0, 1.0, width, dtype=jnp.float32)
    y1 = jnp.linspace(0.0, 1.0, height, dtype=jnp.float32)
    Xg = jnp.broadcast_to(x1[None, :], (height, width))   # X varies along width
    Yg = jnp.broadcast_to(y1[:, None], (height, width))   # Y varies along height
    return Xg, Yg


def _build_wmat(Xpc, Ypc, H, W, npc_pad):
    """Bilinear sampling matrix (HW, npc_pad) built by scattering the 4 corner
    weights of each point (no dense (H, W, npc) intermediate).  Padded point
    columns stay zero."""
    npc = Xpc.shape[0]
    gx = Xpc.astype(jnp.float32) * (W - 1.0)
    gy = Ypc.astype(jnp.float32) * (H - 1.0)
    x0 = jnp.floor(gx)
    x1 = jnp.minimum(x0 + 1.0, W - 1.0)
    wx = gx - x0
    y0 = jnp.floor(gy)
    y1 = jnp.minimum(y0 + 1.0, H - 1.0)
    wy = gy - y0

    x0i = x0.astype(jnp.int32)
    x1i = x1.astype(jnp.int32)
    y0i = y0.astype(jnp.int32)
    y1i = y1.astype(jnp.int32)
    cols = jnp.arange(npc, dtype=jnp.int32)

    wmat = jnp.zeros((H * W, npc_pad), dtype=jnp.float32)
    # Border duplicates (x0==x1 / y0==y1) accumulate correctly via add, and
    # their extra weight is exactly zero there (wx==0 / wy==0).
    wmat = wmat.at[y0i * W + x0i, cols].add((1.0 - wy) * (1.0 - wx))
    wmat = wmat.at[y0i * W + x1i, cols].add((1.0 - wy) * wx)
    wmat = wmat.at[y1i * W + x0i, cols].add(wy * (1.0 - wx))
    wmat = wmat.at[y1i * W + x1i, cols].add(wy * wx)
    return wmat


def _vmem_policy():
    """(budget_bytes, vmem_limit_bytes), generation-aware."""
    cap = None
    try:
        cap = pltpu.get_tpu_info().vmem_capacity_bytes
    except Exception:
        cap = None
    if cap is None:
        # Unknown chip: conservative numbers that are safe everywhere.
        return 20 * 1024 * 1024, 32 * 1024 * 1024
    if cap <= 80 * 1024 * 1024:
        # v7x-class: 64 MiB VMEM per TensorCore -> leave generous headroom.
        return 20 * 1024 * 1024, 30 * 1024 * 1024
    # v5e / v6e: 128 MiB physical VMEM -> can afford bigger tiles.
    return 40 * 1024 * 1024, 64 * 1024 * 1024


def _choose_tile_k(HW, npc_pad, budget_bytes):
    """Full K (no accumulator) when the whole wmat plus a decent img tile fits
    the budget; otherwise the largest multiple-of-128 divisor of HW."""
    full_bytes = (2 * HW * npc_pad + 2 * 512 * HW + 2 * 512 * npc_pad) * 4
    if full_bytes <= budget_bytes:
        return HW
    for cand in (8192, 4096, 2048, 1024, 512, 256, 128):
        if HW % cand == 0:
            return cand
    return HW  # odd HW: fall back to full K (rare)


def _choose_tile_m(M, k_block, npc_pad, budget_bytes, with_acc):
    """Largest multiple-of-8 row tile (<= 4096) fitting the VMEM budget."""
    m_aligned = _round_up(M, 8)
    tile = _round_up(min(4096, m_aligned), 8)
    acc = 1 if with_acc else 0

    def vmem_bytes(t):
        return (2 * t * k_block           # double-buffered img tile
                + 2 * k_block * npc_pad   # double-buffered wmat block
                + 2 * t * npc_pad         # double-buffered out tile
                + acc * t * npc_pad) * 4  # accumulator scratch

    while tile > 8 and vmem_bytes(tile) > budget_bytes:
        tile = max(8, _round_up(tile // 2, 8))

    # Guarantee >= 2 grid steps over M when there is enough work so the
    # "parallel" M axis can be sharded across v7x's two TensorCores.
    if m_aligned >= 256 and pl.cdiv(m_aligned, tile) < 2:
        tile = max(8, _round_up(pl.cdiv(m_aligned, 2), 8))
    return tile


# ----------------------------------------------------------------------------
# Pallas kernels
# ----------------------------------------------------------------------------
def _obs_kernel(img_ref, wmat_ref, out_ref):
    # Full-K path: one MXU matmul per M tile; wmat stays VMEM-resident
    # (constant index map -> no re-DMA across grid steps).
    out_ref[...] = jnp.dot(
        img_ref[...], wmat_ref[...], preferred_element_type=jnp.float32
    )


def _obs_kernel_acc(img_ref, wmat_ref, out_ref, acc_ref):
    # K-tiled path: accumulate partial products over the HW (reduction) axis.
    @pl.when(pl.program_id(1) == 0)
    def _():
        acc_ref[...] = jnp.zeros_like(acc_ref)

    acc_ref[...] += jnp.dot(
        img_ref[...], wmat_ref[...], preferred_element_type=jnp.float32
    )

    @pl.when(pl.program_id(1) == pl.num_programs(1) - 1)
    def _():
        out_ref[...] = acc_ref[...]


# ----------------------------------------------------------------------------
# Wrapper: obsbot_observer.forward
# ----------------------------------------------------------------------------
def obsbot_observer_forward(inp, Xpc, Ypc, *, tile_m=None, tile_k=None):
    B, T, C, H, W = inp.shape
    M = B * T * C
    HW = H * W
    npc = Xpc.shape[0]
    npc_pad = _round_up(npc, 128)

    budget_bytes, vmem_limit = _vmem_policy()

    # Precompute the bilinear sampling matrix once (hoisted out of the grid).
    wmat = _build_wmat(Xpc, Ypc, H, W, npc_pad)            # (HW, npc_pad)

    # No padding copy along M: the grid uses cdiv and Pallas masks the edge.
    img = inp.reshape(M, HW).astype(jnp.float32)

    if tile_k is None:
        tile_k = _choose_tile_k(HW, npc_pad, budget_bytes)
    k_tiled = tile_k < HW
    if tile_m is None:
        tile_m = _choose_tile_m(M, tile_k, npc_pad, budget_bytes, k_tiled)

    grid_m = pl.cdiv(M, tile_m)

    if not k_tiled:
        grid = (grid_m,)
        in_specs = [
            pl.BlockSpec((tile_m, HW), lambda i: (i, 0)),        # image rows
            pl.BlockSpec((HW, npc_pad), lambda i: (0, 0)),       # wmat (resident)
        ]
        out_specs = pl.BlockSpec((tile_m, npc_pad), lambda i: (i, 0))
        scratch = []
        kernel = _obs_kernel
        dims = ("parallel",)
    else:
        grid = (grid_m, HW // tile_k)
        in_specs = [
            pl.BlockSpec((tile_m, tile_k), lambda i, k: (i, k)),     # img stripe
            pl.BlockSpec((tile_k, npc_pad), lambda i, k: (k, 0)),    # wmat stripe
        ]
        out_specs = pl.BlockSpec((tile_m, npc_pad), lambda i, k: (i, 0))
        scratch = [pltpu.VMEM((tile_m, npc_pad), jnp.float32)]
        kernel = _obs_kernel_acc
        dims = ("parallel", "arbitrary")

    out = pl.pallas_call(
        kernel,
        out_shape=jax.ShapeDtypeStruct((M, npc_pad), jnp.float32),
        grid_spec=pltpu.PrefetchScalarGridSpec(
            num_scalar_prefetch=0,
            grid=grid,
            in_specs=in_specs,
            out_specs=out_specs,
            scratch_shapes=scratch,
        ),
        compiler_params=pltpu.CompilerParams(
            dimension_semantics=dims,
            vmem_limit_bytes=vmem_limit,
        ),
    )(img, wmat)

    out = out[:, :npc].reshape(B, T, C, npc)
    # observer_t == observer for the default config -> duplicate in wrapper.
    return out, out


# ----------------------------------------------------------------------------
# Pure-JAX reference (bilinear gather) for correctness checking
# ----------------------------------------------------------------------------
def _reference(inp, Xpc, Ypc):
    B, T, C, H, W = inp.shape
    gx = Xpc * (W - 1.0)
    gy = Ypc * (H - 1.0)
    x0 = jnp.floor(gx).astype(jnp.int32)
    x1 = jnp.minimum(x0 + 1, W - 1)
    y0 = jnp.floor(gy).astype(jnp.int32)
    y1 = jnp.minimum(y0 + 1, H - 1)
    wx = gx - x0.astype(jnp.float32)
    wy = gy - y0.astype(jnp.float32)
    v00 = inp[..., y0, x0]
    v01 = inp[..., y0, x1]
    v10 = inp[..., y1, x0]
    v11 = inp[..., y1, x1]
    return (v00 * (1 - wy) * (1 - wx) + v01 * (1 - wy) * wx
            + v10 * wy * (1 - wx) + v11 * wy * wx)


if __name__ == "__main__":
    # Small shapes consistent with the module's forward signature.
    image_size = 16
    pc_size = 4
    batch = 2
    tsize = 3
    channels = 4

    # __init__: regular pc initialization + regular [0,1] pixel grid.
    Xgrid, Ygrid = xy_grid(image_size, image_size)
    Xpc_g, Ypc_g = xy_grid(pc_size, pc_size)
    Xpc = Xpc_g.flatten()
    Ypc = Ypc_g.flatten()

    key = jax.random.PRNGKey(0)
    x = jax.random.normal(
        key, (batch, tsize, channels, image_size, image_size), dtype=jnp.float32
    )

    ref = _reference(x, Xpc, Ypc)

    # 1) Default path (auto tiling: full-K, lane-dense output).
    xout_t, xout = obsbot_observer_forward(x, Xpc, Ypc)
    jax.block_until_ready((xout_t, xout))
    assert xout_t.shape == (batch, tsize, channels, pc_size * pc_size)
    assert xout.shape == (batch, tsize, channels, pc_size * pc_size)
    assert jnp.allclose(xout_t, ref, atol=1e-5, rtol=1e-5)
    assert jnp.allclose(xout, ref, atol=1e-5, rtol=1e-5)

    # 2) Forced K-tiled + ragged-M path (exercises the accumulator kernel and
    #    the no-pad edge-block handling used for large shapes).
    xout_t2, xout2 = obsbot_observer_forward(x, Xpc, Ypc, tile_m=16, tile_k=128)
    jax.block_until_ready((xout_t2, xout2))
    assert jnp.allclose(xout_t2, ref, atol=1e-5, rtol=1e-5)
    assert jnp.allclose(xout2, ref, atol=1e-5, rtol=1e-5)

    print("KERNEL_OK")
</pallas_src>

<mosaic_0001>
module attributes {stable_mosaic.version = 11 : i64} {
  func.func @_obs_kernel(%arg0: i32, %arg1: memref<24x256xf32, #tpu.memory_space<vmem>>, %arg2: memref<256x128xf32, #tpu.memory_space<vmem>>, %arg3: memref<24x128xf32, #tpu.memory_space<vmem>>) attributes {dimension_semantics = [#tpu.dimension_semantics<parallel>], iteration_bounds = array<i64: 1>, scalar_prefetch = 0 : i64, scratch_operands = 0 : i64, tpu.core_type = #tpu.core_type<tc>, window_params = [{transform_indices = @transform_0, window_bounds = array<i64: 24, 256>}, {pipeline_mode = #tpu.pipeline_mode<synchronous>, transform_indices = @transform_1, window_bounds = array<i64: 256, 128>}, {transform_indices = @transform_2, window_bounds = array<i64: 24, 128>}]} {
    %c0 = arith.constant 0 : index
    %c0_0 = arith.constant 0 : index
    %0 = vector.load %arg1[%c0, %c0_0] : memref<24x256xf32, #tpu.memory_space<vmem>>, vector<24x256xf32>
    %c0_1 = arith.constant 0 : index
    %c0_2 = arith.constant 0 : index
    %1 = vector.load %arg2[%c0_1, %c0_2] : memref<256x128xf32, #tpu.memory_space<vmem>>, vector<256x128xf32>
    %cst = arith.constant dense<0.000000e+00> : vector<24x128xf32>
    %2 = tpu.matmul %0, %1, %cst {dimension_numbers = #tpu.dot_dimension_numbers<[1], [0], [0], [1], [0, 0, 1, 1], [], []>} : vector<24x256xf32>, vector<256x128xf32>, vector<24x128xf32> -> vector<24x128xf32>
    %c0_3 = arith.constant 0 : index
    %c0_4 = arith.constant 0 : index
    %3 = vector.load %arg3[%c0_3, %c0_4] : memref<24x128xf32, #tpu.memory_space<vmem>>, vector<24x128xf32>
    tpu.vector_store %arg3[%c0_3, %c0_4], %2 {strides = array<i32>} : memref<24x128xf32, #tpu.memory_space<vmem>>, vector<24x128xf32>,
    return
  }
  func.func @transform_0(%arg0: i32) -> (i32, i32) {
    %c0_i32 = arith.constant 0 : i32
    %c0_i32_0 = arith.constant 0 : i32
    return %arg0, %c0_i32 : i32, i32
  }
  func.func @transform_1(%arg0: i32) -> (i32, i32) {
    %c0_i32 = arith.constant 0 : i32
    %c0_i32_0 = arith.constant 0 : i32
    %c0_i32_1 = arith.constant 0 : i32
    return %c0_i32, %c0_i32_0 : i32, i32
  }
  func.func @transform_2(%arg0: i32) -> (i32, i32) {
    %c0_i32 = arith.constant 0 : i32
    %c0_i32_0 = arith.constant 0 : i32
    return %arg0, %c0_i32 : i32, i32
  }
}

</mosaic_0001>

<llo_original>
// kernel: tpu_custom_call.1
$region0: #{tpu_custom_call.1}
  #allocation0 [shape = 'u32[]', space=smem, size = 0x4, offset = 0x4, fixed_abs, tag = 'smem constant byte address 0x4 - core index']
  #allocation1 [shape = 'u32[144,128]{1,0:T(1,128)}', space=vmem, size = 0x12000, scoped, tag = 'internal scratch']
  %s0 = inlined_call_operand.hbm [shape: f32[24,256], index: 0, kind: input, shape index: {}]
  %s1 = inlined_call_operand.hbm [shape: f32[256,128], index: 1, kind: input, shape index: {}]
  %s2 = inlined_call_operand.hbm [shape: f32[24,128], index: 2, kind: output, shape index: {}]
  %s3 = sld [smem:[#allocation0]]
  $region26: #{tpu_custom_call.1} parent=0
    _
  %s5 = ssub.s32 1, %s3
  %s6 = scalar_select 0, %s5, %s3
  $region1: #{tpu_custom_call.1} parent=0
    #allocation2 [shape = 'u8[24576]{0}', space=vmem, size = 0x6000, scoped, tag = 'input window, operand 0, single buffered']
    #allocation3 [shape = 's32[1]{0}', space=sflag, size = 0x4, scoped, tag = 'scoped memory for tpu_custom_call.1']
    #allocation4 [shape = 's32[1]{0}', space=sflag, size = 0x4, scoped, tag = 'scoped memory for tpu_custom_call.1']
    #allocation5 [shape = 'u8[131072]{0}', space=vmem, size = 0x20000, scoped, tag = 'input window, operand 1, single buffered']
    #allocation6 [shape = 's32[1]{0}', space=sflag, size = 0x4, scoped, tag = 'scoped memory for tpu_custom_call.1']
    #allocation7 [shape = 'u8[12288]{0}', space=vmem, size = 0x3000, scoped, tag = 'output window, operand 0, single buffered']
    %7 = vsyncpa [#allocation3], 0
    %8 = vsyncpa [#allocation6], 0
    %9 = vsyncpa [#allocation4], 0
    // Predicated region
    $region2: #{tpu_custom_call.1} parent=1 // pred_check
      _
    $region3: #{tpu_custom_call.1} parent=1 // pred_check_branch
      %11 = sbr.rel (0) target = $region5
    $region4: #{tpu_custom_call.1} parent=1 // pred_region
      %s13 = ssub.s32 768, 768
      %14 = vsyncadd [#allocation3], %s13
      %s15 = sshll.u32 [#allocation2], 4
      %s16 = int_to_ptr.vmem [resolvable:$true] %s15
      %21 = dma.hbm_to_vmem [thread:$0]  %s0, 768, %s16, [#allocation3], 256, 256, 16
    $region5: #{tpu_custom_call.1} parent=1 // pred_fallthru
      _
    // Predicated region
    $region6: #{tpu_custom_call.1} parent=1 // pred_check
      _
    $region7: #{tpu_custom_call.1} parent=1 // pred_check_branch
      %23 = sbr.rel (0) target = $region9
    $region8: #{tpu_custom_call.1} parent=1 // pred_region
      %s25 = ssub.s32 4096, 4096
      %26 = vsyncadd [#allocation6], %s25
      %s27 = sshll.u32 [#allocation5], 4
      %s28 = int_to_ptr.vmem [resolvable:$true] %s27
      %33 = dma.hbm_to_vmem [thread:$0]  %s1, 4096, %s28, [#allocation6], 128, 128, 8
    $region9: #{tpu_custom_call.1} parent=1 // pred_fallthru
      _
    // Predicated region
    $region10: #{tpu_custom_call.1} parent=1 // pred_check
      _
    $region11: #{tpu_custom_call.1} parent=1 // pred_check_branch
      %35 = sbr.rel (0) target = $region13
    $region12: #{tpu_custom_call.1} parent=1 // pred_region
      %36 = dma.done [#allocation3], 768
    $region13: #{tpu_custom_call.1} parent=1 // pred_fallthru
      _
    // Predicated region
    $region14: #{tpu_custom_call.1} parent=1 // pred_check
      _
    $region15: #{tpu_custom_call.1} parent=1 // pred_check_branch
      %38 = sbr.rel (0) target = $region17
    $region16: #{tpu_custom_call.1} parent=1 // pred_region
      %39 = dma.done [#allocation6], 4096
    $region17: #{tpu_custom_call.1} parent=1 // pred_fallthru
      _
    %v40 = vld [vmem:[#allocation2] sm:$0xff]
    %v41 = vld [vmem:[#allocation2 + $0x8] sm:$0xff]
    %v42 = vld [vmem:[#allocation2 + $0x10] sm:$0xff]
    %v43 = vld [vmem:[#allocation2 + $0x18] sm:$0xff]
    %v44 = vld [vmem:[#allocation2 + $0x20] sm:$0xff]
    %v45 = vld [vmem:[#allocation2 + $0x28] sm:$0xff]
    %v46 = vld [vmem:[#allocation5] sm:$0xff]
    %v47 = vld [vmem:[#allocation5 + $0x8] sm:$0xff]
    %v48 = vld [vmem:[#allocation5 + $0x10] sm:$0xff]
    %v49 = vld [vmem:[#allocation5 + $0x18] sm:$0xff]
    %v50 = vld [vmem:[#allocation5 + $0x20] sm:$0xff]
    %v51 = vld [vmem:[#allocation5 + $0x28] sm:$0xff]
    %v52 = vld [vmem:[#allocation5 + $0x30] sm:$0xff]
    %v53 = vld [vmem:[#allocation5 + $0x38] sm:$0xff]
    %v54 = vld [vmem:[#allocation5 + $0x40] sm:$0xff]
    %v55 = vld [vmem:[#allocation5 + $0x48] sm:$0xff]
    %v56 = vld [vmem:[#allocation5 + $0x50] sm:$0xff]
    %v57 = vld [vmem:[#allocation5 + $0x58] sm:$0xff]
    %v58 = vld [vmem:[#allocation5 + $0x60] sm:$0xff]
    %v59 = vld [vmem:[#allocation5 + $0x68] sm:$0xff]
    %v60 = vld [vmem:[#allocation5 + $0x70] sm:$0xff]
    %v61 = vld [vmem:[#allocation5 + $0x78] sm:$0xff]
    %v62 = vld [vmem:[#allocation5 + $0x80] sm:$0xff]
    %v63 = vld [vmem:[#allocation5 + $0x88] sm:$0xff]
    %v64 = vld [vmem:[#allocation5 + $0x90] sm:$0xff]
    %v65 = vld [vmem:[#allocation5 + $0x98] sm:$0xff]
    %v66 = vld [vmem:[#allocation5 + $0xa0] sm:$0xff]
    %v67 = vld [vmem:[#allocation5 + $0xa8] sm:$0xff]
    %v68 = vld [vmem:[#allocation5 + $0xb0] sm:$0xff]
    %v69 = vld [vmem:[#allocation5 + $0xb8] sm:$0xff]
    %v70 = vld [vmem:[#allocation5 + $0xc0] sm:$0xff]
    %v71 = vld [vmem:[#allocation5 + $0xc8] sm:$0xff]
    %v72 = vld [vmem:[#allocation5 + $0xd0] sm:$0xff]
    %v73 = vld [vmem:[#allocation5 + $0xd8] sm:$0xff]
    %v74 = vld [vmem:[#allocation5 + $0xe0] sm:$0xff]
    %v75 = vld [vmem:[#allocation5 + $0xe8] sm:$0xff]
    %v76 = vld [vmem:[#allocation5 + $0xf0] sm:$0xff]
    %v77 = vld [vmem:[#allocation5 + $0xf8] sm:$0xff]
    %78 = vmatprep.subr.mxu0 0.0
    %79 = vmatpush1.msra.mxu0 %v46
    %80 = vmatprep.subr.mxu0 0.0
    %81 = vmatpush1.msra.mxu0 %v47
    %82 = vmatprep.subr.mxu0 0.0
    %83 = vmatpush1.msra.mxu0 %v48
    %84 = vmatprep.subr.mxu0 0.0
    %85 = vmatpush1.msra.mxu0 %v49
    %86 = vmatprep.subr.mxu0 0.0
    %87 = vmatpush1.msra.mxu0 %v50
    %88 = vmatprep.subr.mxu0 0.0
    %89 = vmatpush1.msra.mxu0 %v51
    %90 = vmatprep.subr.mxu0 0.0
    %91 = vmatpush1.msra.mxu0 %v52
    %92 = vmatprep.subr.mxu0 0.0
    %93 = vmatpush1.msra.mxu0 %v53
    %94 = vmatprep.subr.mxu0 0.0
    %95 = vmatpush1.msra.mxu0 %v54
    %96 = vmatprep.subr.mxu0 0.0
    %97 = vmatpush1.msra.mxu0 %v55
    %98 = vmatprep.subr.mxu0 0.0
    %99 = vmatpush1.msra.mxu0 %v56
    %100 = vmatprep.subr.mxu0 0.0
    %101 = vmatpush1.msra.mxu0 %v57
    %102 = vmatprep.subr.mxu0 0.0
    %103 = vmatpush1.msra.mxu0 %v58
    %104 = vmatprep.subr.mxu0 0.0
    %105 = vmatpush1.msra.mxu0 %v59
    %106 = vmatprep.subr.mxu0 0.0
    %107 = vmatpush1.msra.mxu0 %v60
    %108 = vmatprep.subr.mxu0 0.0
    %109 = vmatpush1.msra.mxu0 %v61
    %110 = vmatprep.subr.mxu0 0.0
    %111 = vmatpush1.msra.mxu0 %v62
    %112 = vmatprep.subr.mxu0 0.0
    %113 = vmatpush1.msra.mxu0 %v63
    %114 = vmatprep.subr.mxu0 0.0
    %115 = vmatpush1.msra.mxu0 %v64
    %116 = vmatprep.subr.mxu0 0.0
    %117 = vmatpush1.msra.mxu0 %v65
    %118 = vmatprep.subr.mxu0 0.0
    %119 = vmatpush1.msra.mxu0 %v66
    %120 = vmatprep.subr.mxu0 0.0
    %121 = vmatpush1.msra.mxu0 %v67
    %122 = vmatprep.subr.mxu0 0.0
    %123 = vmatpush1.msra.mxu0 %v68
    %124 = vmatprep.subr.mxu0 0.0
    %125 = vmatpush1.msra.mxu0 %v69
    %126 = vmatprep.subr.mxu0 0.0
    %127 = vmatpush1.msra.mxu0 %v70
    %128 = vmatprep.subr.mxu0 0.0
    %129 = vmatpush1.msra.mxu0 %v71
    %130 = vmatprep.subr.mxu0 0.0
    %131 = vmatpush1.msra.mxu0 %v72
    %132 = vmatprep.subr.mxu0 0.0
    %133 = vmatpush1.msra.mxu0 %v73
    %134 = vmatprep.subr.mxu0 0.0
    %135 = vmatpush1.msra.mxu0 %v74
    %136 = vmatprep.subr.mxu0 0.0
    %137 = vmatpush1.msra.mxu0 %v75
    %138 = vmatprep.subr.mxu0 0.0
    %139 = vmatpush1.msra.mxu0 %v76
    %140 = vmatprep.subr.mxu0 0.0
    %141 = vmatpush1.msra.mxu0 %v77
    %142 = vmatprep.mubr.f32.mxu0 %v41
    %143 = vmatmul.mubr.f32.gmra.mrb[0].mxu0 %v40
    %v144 = vpop.f32.mrb[0].mxu0
    %v145 = vadd.f32 0.0, %v144
    %v146 = vpop.f32.mrb[0].mxu0
    %147 = vmatprep.mubr.f32.mxu0 %v43
    %148 = vmatmul.mubr.f32.gmra.mrb[0].mxu0 %v42
    %v149 = vpop.f32.mrb[0].mxu0
    %v150 = vadd.f32 0.0, %v149
    %v151 = vpop.f32.mrb[0].mxu0
    %152 = vmatprep.mubr.f32.mxu0 %v45
    %153 = vmatmul.mubr.f32.gmra.mrb[0].mxu0 %v44
    %v154 = vpop.f32.mrb[0].mxu0
    %v155 = vadd.f32 0.0, %v154
    %v156 = vpop.f32.mrb[0].mxu0
    %157 = vdwg.mxu0
    %158 = vst [vmem:[#allocation7] sm:$0xff] %v145
    %159 = vst [vmem:[#allocation7 + $0x8] sm:$0xff] %v150
    %160 = vst [vmem:[#allocation7 + $0x10] sm:$0xff] %v155
    // Predicated region
    $region18: #{tpu_custom_call.1} parent=1 // pred_check
      _
    $region19: #{tpu_custom_call.1} parent=1 // pred_check_branch
      %162 = sbr.rel (0) target = $region21
    $region20: #{tpu_custom_call.1} parent=1 // pred_region
      %s164 = ssub.s32 384, 384
      %165 = vsyncadd [#allocation4], %s164
      %s166 = sshll.u32 [#allocation7], 4
      %s167 = int_to_ptr.vmem [resolvable:$true] %s166
      %172 = dma.vmem_to_hbm [thread:$0]  %s167, 384, %s2, [#allocation4], 128, 128, 8
    $region21: #{tpu_custom_call.1} parent=1 // pred_fallthru
      _
    // Predicated region
    $region22: #{tpu_custom_call.1} parent=1 // pred_check
      _
    $region23: #{tpu_custom_call.1} parent=1 // pred_check_branch
      %174 = sbr.rel (0) target = $region25
    $region24: #{tpu_custom_call.1} parent=1 // pred_region
      %175 = dma.done [#allocation4], 384
    $region25: #{tpu_custom_call.1} parent=1 // pred_fallthru
      _
    %176 = vsyncpa [#allocation3], 1
    %177 = vsyncpa [#allocation6], 1
    %178 = vsyncpa [#allocation4], 1

</llo_original>
